<compile_context>
chip_gen: v7x
topology: tpu7x:2x2x1
jax: 0.10.0
libtpu: 0.0.40
codegen_flags: <defaults>
</compile_context>

<pallas_src>
import math

import jax
import jax.numpy as jnp
import numpy as np
from jax.experimental import pallas as pl
from jax.experimental.pallas import tpu as pltpu

# ------------------------------------------------------------------
# Deterministic "parameters" (mirrors the PyTorch __init__ constants).
# ------------------------------------------------------------------
PRIOR_M = 0.0
PRIOR_S = 10.0

LIK_MEANS = (-4.0, 4.0)
LIK_STD = 0.2
LIK_LOG_PAIS = (math.log(0.3), math.log(0.7))

Q_MEANS = (-2.0, 2.0)
Q_STD = 0.4
Q_LOG_PAIS = (math.log(0.5), math.log(0.5))

_HALF_LOG_2PI = 0.5 * math.log(2.0 * math.pi)

_LANE = 128                  # vreg lane width (last dim)
_MAX_BLOCK_ROWS = 4096       # (4096,128) f32 = 2 MiB per buffer


def _log_gaussian(x, mean, std):
    # log N(x; mean, std); mean/std are Python floats -> constants fold.
    inv_2s2 = 1.0 / (2.0 * std * std)
    c = -_HALF_LOG_2PI - math.log(std)
    d = x - mean
    return c - d * d * inv_2s2


def _log_gmm_equal_std(x, means, std, log_pais):
    """logsumexp_k [log_pai_k + log N(x; m_k, std)] for K=2 with equal stds.

    Equal stds make lp0 - lp1 affine in x, so
        logsumexp(lp0, lp1) = lp1 + softplus(lp0 - lp1)
    which costs 1 exp + 1 log1p per element (vs 2 exp + 1 log for the
    max-stabilized form). Stable softplus: max(d,0) + log1p(exp(-|d|)).
    """
    m0, m1 = means
    inv_2s2 = 1.0 / (2.0 * std * std)

    c1 = log_pais[1] - _HALF_LOG_2PI - math.log(std)
    d1 = x - m1
    lp1 = c1 - d1 * d1 * inv_2s2

    # d = lp0 - lp1 = a*x + b   (constants fold at trace time)
    a = 2.0 * (m0 - m1) * inv_2s2
    b = (log_pais[0] - log_pais[1]) + (m1 * m1 - m0 * m0) * inv_2s2
    d = a * x + b

    sp = jnp.maximum(d, 0.0) + jnp.log1p(jnp.exp(-jnp.abs(d)))
    return lp1 + sp


def _h_math(x_f32):
    """h(x) for an f32 array; shared by the Pallas kernel and the jnp tail."""
    log_q = _log_gmm_equal_std(x_f32, Q_MEANS, Q_STD, Q_LOG_PAIS)
    log_prior = _log_gaussian(x_f32, PRIOR_M, PRIOR_S)
    log_lik = _log_gmm_equal_std(x_f32, LIK_MEANS, LIK_STD, LIK_LOG_PAIS)
    return log_q - log_prior - log_lik


# ------------------------------------------------------------------
# Pallas kernel: elementwise h(x) on one VMEM tile.
# ------------------------------------------------------------------
def h_kernel(x_ref, o_ref):
    o_ref[...] = _h_math(x_ref[...].astype(jnp.float32)).astype(o_ref.dtype)


def _block_rows(rows, sublane):
    """Rows per grid step: big blocks, but >=2 roughly-equal steps when the
    array allows it (so v7x megacore sharding has work on both TCs)."""
    if rows < 2 * sublane:
        return rows
    num_steps = max(2, -(-rows // _MAX_BLOCK_ROWS))      # ceil div
    sub = -(-rows // num_steps)                          # balanced split
    sub = -(-sub // sublane) * sublane                   # round up to sublane
    return min(sub, rows)


def _h_forward_impl(x):
    """x: any-shape float array of samples. Returns h(x) with same shape/dtype."""
    orig_shape = x.shape
    dtype = x.dtype
    flat = x.reshape(-1)
    n = flat.shape[0]

    if n == 0:                      # empty-input guard
        return x

    itemsize = np.dtype(dtype).itemsize
    sublane = 8 * max(1, 4 // itemsize)   # f32 -> 8 rows, bf16 -> 16 rows
    tile_elems = sublane * _LANE

    rem = n % tile_elems
    n_main = n - rem

    parts = []

    if n_main > 0:
        bulk = flat if rem == 0 else flat[:n_main]
        rows = n_main // _LANE
        x2d = bulk.reshape(rows, _LANE)

        sub = _block_rows(rows, sublane)
        grid = (pl.cdiv(rows, sub),)
        nbytes = n_main * itemsize

        out2d = pl.pallas_call(
            h_kernel,
            out_shape=jax.ShapeDtypeStruct((rows, _LANE), dtype),
            grid_spec=pl.GridSpec(
                grid=grid,
                in_specs=[pl.BlockSpec((sub, _LANE), lambda i: (i, 0))],
                out_specs=pl.BlockSpec((sub, _LANE), lambda i: (i, 0)),
            ),
            compiler_params=pltpu.CompilerParams(
                dimension_semantics=("parallel",),
                vmem_limit_bytes=32 * 1024 * 1024,
            ),
            cost_estimate=pl.CostEstimate(
                flops=30 * n_main,
                transcendentals=4 * n_main,
                bytes_accessed=2 * nbytes,
            ),
        )(x2d)
        parts.append(out2d.reshape(-1))

    if rem > 0:
        # Tiny unaligned tail (< sublane*128 elems): plain jnp, no pad/slice
        # round trips through HBM for the bulk.
        tail = flat[n_main:]
        parts.append(_h_math(tail.astype(jnp.float32)).astype(dtype))

    out_flat = parts[0] if len(parts) == 1 else jnp.concatenate(parts)
    return out_flat.reshape(orig_shape)


h_forward = jax.jit(_h_forward_impl)


# ------------------------------------------------------------------
# Float64 numpy reference (max-stabilized logsumexp, original formulation).
# ------------------------------------------------------------------
def _h_reference_np(x64):
    def log_gauss(x, m, s):
        return -0.5 * np.log(2.0 * np.pi) - np.log(s) - (x - m) ** 2 / (2.0 * s * s)

    def log_gmm(x, means, stds, log_pais):
        lps = np.stack([lp + log_gauss(x, m, s)
                        for lp, m, s in zip(log_pais, means, stds)])
        mx = lps.max(axis=0)
        return mx + np.log(np.exp(lps - mx).sum(axis=0))

    lq = log_gmm(x64, Q_MEANS, (Q_STD, Q_STD), Q_LOG_PAIS)
    lpri = log_gauss(x64, PRIOR_M, PRIOR_S)
    llik = log_gmm(x64, LIK_MEANS, (LIK_STD, LIK_STD), LIK_LOG_PAIS)
    h = lq - lpri - llik
    # Scale of the contributing terms: f32 rounding error of h is bounded by
    # ~eps_f32 * scale because of cancellation between the (possibly large)
    # log terms, so measure error relative to this scale.
    scale = 1.0 + np.abs(lq) + np.abs(lpri) + np.abs(llik)
    return h, scale


def _check(out, x, tol=2e-3):
    x64 = np.asarray(x, dtype=np.float64)
    ref, scale = _h_reference_np(x64)
    out64 = np.asarray(out, dtype=np.float64)
    assert np.all(np.isfinite(out64)), "non-finite kernel output"
    err = np.max(np.abs(out64 - ref) / scale)
    assert err < tol, f"max scaled err {err}"


if __name__ == "__main__":
    key = jax.random.PRNGKey(0)
    k1, k2 = jax.random.split(key)

    # Elementwise forward, shape arbitrary. 2*4*16*16 = 2048 samples -> aligned
    # bulk path; grid of 2 steps (megacore-friendly).
    x = jax.random.normal(k1, (2, 4, 16, 16), dtype=jnp.float32) * 3.0
    out = jax.block_until_ready(h_forward(x))
    assert out.shape == x.shape and out.dtype == x.dtype
    _check(out, x)

    # Ragged 1-D sample count: exercises aligned-bulk Pallas + jnp tail path.
    x2 = jax.random.normal(k2, (5000,), dtype=jnp.float32) * 3.0
    out2 = jax.block_until_ready(h_forward(x2))
    assert out2.shape == x2.shape and out2.dtype == x2.dtype
    _check(out2, x2)

    print("KERNEL_OK")
</pallas_src>

<mosaic_0001>
module attributes {stable_mosaic.version = 11 : i64} {
  func.func @h_kernel(%arg0: i32, %arg1: memref<8x128xf32, #tpu.memory_space<vmem>>, %arg2: memref<8x128xf32, #tpu.memory_space<vmem>>) attributes {dimension_semantics = [#tpu.dimension_semantics<parallel>], iteration_bounds = array<i64: 2>, scalar_prefetch = 0 : i64, scratch_operands = 0 : i64, tpu.core_type = #tpu.core_type<tc>, window_params = [{transform_indices = @transform_0, window_bounds = array<i64: 8, 128>}, {transform_indices = @transform_1, window_bounds = array<i64: 8, 128>}]} {
    %c0 = arith.constant 0 : index
    %c0_0 = arith.constant 0 : index
    %0 = vector.load %arg1[%c0, %c0_0] : memref<8x128xf32, #tpu.memory_space<vmem>>, vector<8x128xf32>
    %cst = arith.constant 2.000000e+00 : f32
    %1 = vector.broadcast %cst : f32 to vector<8x128xf32>
    %2 = arith.subf %0, %1 : vector<8x128xf32>
    %3 = arith.mulf %2, %2 : vector<8x128xf32>
    %cst_1 = arith.constant 3.125000e+00 : f32
    %4 = vector.broadcast %cst_1 : f32 to vector<8x128xf32>
    %5 = arith.mulf %3, %4 : vector<8x128xf32>
    %cst_2 = arith.constant -0.695794999 : f32
    %6 = vector.broadcast %cst_2 : f32 to vector<8x128xf32>
    %7 = arith.subf %6, %5 : vector<8x128xf32>
    %cst_3 = arith.constant -2.500000e+01 : f32
    %8 = vector.broadcast %cst_3 : f32 to vector<8x128xf32>
    %9 = arith.mulf %8, %0 : vector<8x128xf32>
    %cst_4 = arith.constant 0.000000e+00 : f32
    %10 = vector.broadcast %cst_4 : f32 to vector<8x128xf32>
    %11 = arith.addf %9, %10 : vector<8x128xf32>
    %cst_5 = arith.constant 0.000000e+00 : f32
    %12 = vector.broadcast %cst_5 : f32 to vector<8x128xf32>
    %13 = arith.maximumf %11, %12 : vector<8x128xf32>
    %14 = math.absf %11 : vector<8x128xf32>
    %cst_6 = arith.constant 0.000000e+00 : f32
    %15 = vector.broadcast %cst_6 : f32 to vector<8x128xf32>
    %16 = arith.subf %15, %14 : vector<8x128xf32>
    %17 = math.exp %16 : vector<8x128xf32>
    %18 = math.log1p %17 : vector<8x128xf32>
    %19 = arith.addf %13, %18 : vector<8x128xf32>
    %20 = arith.addf %7, %19 : vector<8x128xf32>
    %cst_7 = arith.constant 0.000000e+00 : f32
    %21 = vector.broadcast %cst_7 : f32 to vector<8x128xf32>
    %22 = arith.subf %0, %21 : vector<8x128xf32>
    %23 = arith.mulf %22, %22 : vector<8x128xf32>
    %cst_8 = arith.constant 5.000000e-03 : f32
    %24 = vector.broadcast %cst_8 : f32 to vector<8x128xf32>
    %25 = arith.mulf %23, %24 : vector<8x128xf32>
    %cst_9 = arith.constant -3.22152352 : f32
    %26 = vector.broadcast %cst_9 : f32 to vector<8x128xf32>
    %27 = arith.subf %26, %25 : vector<8x128xf32>
    %cst_10 = arith.constant 4.000000e+00 : f32
    %28 = vector.broadcast %cst_10 : f32 to vector<8x128xf32>
    %29 = arith.subf %0, %28 : vector<8x128xf32>
    %30 = arith.mulf %29, %29 : vector<8x128xf32>
    %cst_11 = arith.constant 1.250000e+01 : f32
    %31 = vector.broadcast %cst_11 : f32 to vector<8x128xf32>
    %32 = arith.mulf %30, %31 : vector<8x128xf32>
    %cst_12 = arith.constant 0.333824426 : f32
    %33 = vector.broadcast %cst_12 : f32 to vector<8x128xf32>
    %34 = arith.subf %33, %32 : vector<8x128xf32>
    %cst_13 = arith.constant -2.000000e+02 : f32
    %35 = vector.broadcast %cst_13 : f32 to vector<8x128xf32>
    %36 = arith.mulf %35, %0 : vector<8x128xf32>
    %cst_14 = arith.constant -0.847297847 : f32
    %37 = vector.broadcast %cst_14 : f32 to vector<8x128xf32>
    %38 = arith.addf %36, %37 : vector<8x128xf32>
    %cst_15 = arith.constant 0.000000e+00 : f32
    %39 = vector.broadcast %cst_15 : f32 to vector<8x128xf32>
    %40 = arith.maximumf %38, %39 : vector<8x128xf32>
    %41 = math.absf %38 : vector<8x128xf32>
    %cst_16 = arith.constant 0.000000e+00 : f32
    %42 = vector.broadcast %cst_16 : f32 to vector<8x128xf32>
    %43 = arith.subf %42, %41 : vector<8x128xf32>
    %44 = math.exp %43 : vector<8x128xf32>
    %45 = math.log1p %44 : vector<8x128xf32>
    %46 = arith.addf %40, %45 : vector<8x128xf32>
    %47 = arith.addf %34, %46 : vector<8x128xf32>
    %48 = arith.subf %20, %27 : vector<8x128xf32>
    %49 = arith.subf %48, %47 : vector<8x128xf32>
    %c0_17 = arith.constant 0 : index
    %c0_18 = arith.constant 0 : index
    %50 = vector.load %arg2[%c0_17, %c0_18] : memref<8x128xf32, #tpu.memory_space<vmem>>, vector<8x128xf32>
    tpu.vector_store %arg2[%c0_17, %c0_18], %49 {strides = array<i32>} : memref<8x128xf32, #tpu.memory_space<vmem>>, vector<8x128xf32>,
    return
  }
  func.func @transform_0(%arg0: i32) -> (i32, i32) {
    %c0_i32 = arith.constant 0 : i32
    %c0_i32_0 = arith.constant 0 : i32
    return %arg0, %c0_i32 : i32, i32
  }
  func.func @transform_1(%arg0: i32) -> (i32, i32) {
    %c0_i32 = arith.constant 0 : i32
    %c0_i32_0 = arith.constant 0 : i32
    return %arg0, %c0_i32 : i32, i32
  }
}

</mosaic_0001>

<llo_original>
// kernel: _h_forward_impl.1
$region0: #{_h_forward_impl.1}
  #allocation0 [shape = 'u32[]', space=smem, size = 0x4, offset = 0x4, fixed_abs, tag = 'smem constant byte address 0x4 - core index']
  #allocation1 [shape = 'u32[144,128]{1,0:T(1,128)}', space=vmem, size = 0x12000, scoped, tag = 'internal scratch']
  %s0 = inlined_call_operand.vmem [shape: f32[16,128], index: 0, kind: input, shape index: {}]
  %s1 = inlined_call_operand.vmem [shape: f32[16,128], index: 1, kind: output, shape index: {}]
  %s2 = sld [smem:[#allocation0]]
  $region37: #{_h_forward_impl.1} parent=0
    _
  %s4 = ssub.s32 1, %s2
  %s5 = scalar_select 0, %s4, %s2
  loop: start=0, step=1, limit=4
  $region2: #{_h_forward_impl.1} parent=0 // loop_pre_header
    _
  $region3: #{_h_forward_impl.1} parent=0 // loop_header
    %s7 = sphi 0, %s11
    %p8 = scmp.ge.s32.totalorder %s7, 4
    %s17 = sphi 0, %s19
    %s20 = sphi 0, %s17
    %s21 = sphi 0, %s20
    %s37 = sphi 0, %s21
    %s43 = sphi 0, %s45
    %s46 = sphi 0, %s43
    %s47 = sphi 0, %s46
    %s63 = sphi 0, %s47
  $region4: #{_h_forward_impl.1} parent=0 // loop_header_branch
    %10 = sbr.rel (%p8) target = $region8
  $region5: #{_h_forward_impl.1} parent=0 // loop_body
    %s12 = ssub.s32 %s7, 1
    %s13 = ssub.s32 %s7, 2
    %s14 = sadd.s32 %s7, 1
    %s15 = ssub.s32 %s7, %s14
    %p16 = scmp.eq.s32.totalorder %s15, 0
    %s18 = sadd.s32 %s17, 1
    %s19 = scalar_select %p16, %s17, %s18
    %p22 = pneg %p16
    %p23 = scmp.eq.s32.totalorder %s7, 1
    %p24 = por %p22, %p23
    %p25 = scmp.ne.s32.totalorder %s17, %s20
    %p26 = scmp.eq.s32.totalorder %s7, 0
    %p27 = por %p25, %p26
    %p28 = scmp.ne.s32.totalorder %s17, %s20
    %p29 = scmp.eq.s32.totalorder %s12, 1
    %p30 = por %p28, %p29
    %p31 = scmp.ne.s32.totalorder %s20, %s21
    %p32 = scmp.eq.s32.totalorder %s12, 0
    %p33 = por %p31, %p32
    %p34 = scmp.ne.s32.totalorder %s20, %s21
    %p35 = scmp.eq.s32.totalorder %s13, 1
    %p36 = por %p34, %p35
    %p38 = scmp.ne.s32.totalorder %s21, %s37
    %p39 = scmp.eq.s32.totalorder %s13, 0
    %p40 = por %p38, %p39
    %s41 = ssub.s32 %s7, %s14
    %p42 = scmp.eq.s32.totalorder %s41, 0
    %s44 = sadd.s32 %s43, 1
    %s45 = scalar_select %p42, %s43, %s44
    %p48 = pneg %p42
    %p49 = scmp.eq.s32.totalorder %s7, 1
    %p50 = por %p48, %p49
    %p51 = scmp.ne.s32.totalorder %s43, %s46
    %p52 = scmp.eq.s32.totalorder %s7, 0
    %p53 = por %p51, %p52
    %p54 = scmp.ne.s32.totalorder %s43, %s46
    %p55 = scmp.eq.s32.totalorder %s12, 1
    %p56 = por %p54, %p55
    %p57 = scmp.ne.s32.totalorder %s46, %s47
    %p58 = scmp.eq.s32.totalorder %s12, 0
    %p59 = por %p57, %p58
    %p60 = scmp.ne.s32.totalorder %s46, %s47
    %p61 = scmp.eq.s32.totalorder %s13, 1
    %p62 = por %p60, %p61
    %p64 = scmp.ne.s32.totalorder %s47, %s63
    %p65 = scmp.eq.s32.totalorder %s13, 0
    %p66 = por %p64, %p65
    %p67 = scmp.le.s32.totalorder 1, %s7
    %p68 = scmp.lt.s32.totalorder %s7, 3
    %p69 = pnand %p67, %p68
    %p70 = pneg %p69
    // Predicated region
    $region9: #{_h_forward_impl.1} parent=5 // pred_check
      _
    $region10: #{_h_forward_impl.1} parent=5 // pred_check_branch
      %72 = sbr.rel (%p69) target = $region12
    $region11: #{_h_forward_impl.1} parent=5 // pred_region
      %s73 = ssub.s32 %s7, 1
    $region12: #{_h_forward_impl.1} parent=5 // pred_fallthru
      _
    %p74 = scmp.lt.s32.totalorder %s7, 2
    // Predicated region
    $region13: #{_h_forward_impl.1} parent=5 // pred_check
      %p75 = pneg %p74
    $region14: #{_h_forward_impl.1} parent=5 // pred_check_branch
      %77 = sbr.rel (%p75) target = $region16
    $region15: #{_h_forward_impl.1} parent=5 // pred_region
      // Predicated region
      $region17: #{_h_forward_impl.1} parent=15 // pred_check
        %p78 = pneg %p27
      $region18: #{_h_forward_impl.1} parent=15 // pred_check_branch
        %80 = sbr.rel (%p78) target = $region20
      $region19: #{_h_forward_impl.1} parent=15 // pred_region
        %p81 = scmp.lt.s32.totalorder %s7, 1
        %s82 = scalar_select %p81, %s7, 1
        %s83 = smul.addr %s82, 8
        %s84 = scalar_lea.vmem %s0, %s83
      $region20: #{_h_forward_impl.1} parent=15 // pred_fallthru
        _
    $region16: #{_h_forward_impl.1} parent=5 // pred_fallthru
      _
    %p85 = scmp.le.s32.totalorder 1, %s7
    %p86 = scmp.lt.s32.totalorder %s7, 3
    %p87 = pnand %p85, %p86
    %p88 = pneg %p87
    // Predicated region
    $region21: #{_h_forward_impl.1} parent=5 // pred_check
      _
    $region22: #{_h_forward_impl.1} parent=5 // pred_check_branch
      %90 = sbr.rel (%p87) target = $region24
    $region23: #{_h_forward_impl.1} parent=5 // pred_region
      %s91 = ssub.s32 %s7, 1
      %p92 = scmp.lt.s32.totalorder %s12, 1
      %s93 = scalar_select %p92, %s12, 1
      %s94 = smul.addr %s93, 8
      %s95 = scalar_lea.vmem %s0, %s94
      %p96 = pneg %p33
      %p97 = pneg %p30
      %p98 = pneg %p59
      %p99 = pneg %p56
      %p100 = scmp.lt.s32.totalorder %s12, 1
      %s101 = scalar_select %p100, %s12, 1
      %s102 = smul.addr %s101, 8
      %s103 = scalar_lea.vmem %s1, %s102
      %p104 = scmp.lt.s32.totalorder %s12, 1
      %s105 = scalar_select %p104, %s12, 1
      %s106 = smul.addr %s105, 8
      %s107 = scalar_lea.vmem %s0, %s106
      %p108 = scmp.lt.s32.totalorder %s12, 1
      %s109 = scalar_select %p108, %s12, 1
      %s110 = smul.addr %s109, 8
      %s111 = scalar_lea.vmem %s1, %s110
      %v112 = vld [vmem:[%s107] sm:$0xff]
      %v113 = vsub.f32 %v112, 2.0
      %v114 = vmul.f32 %v113, %v113
      %v115 = vmul.f32 %v114, 3.125
      %v116 = vsub.f32 -0.695795, %v115
      %v117 = vmul.f32 %v112, -25.0
      %v118 = vadd.f32 %v117, 0.0
      %v119 = vmax.f32 %v118, 0.0
      %v120 = vand.u32 2147483647, %v118
      %v121 = vsub.f32 0.0, %v120
      %v122 = vmul.f32 %v121, 1.442695
      %v123 = vpow.pop %v122
      %v124 = vadd.f32 %v123, 1.0
      %v125 = vlog2.pop %v124
      %v126 = vmul.f32 %v125, 0.6931472
      %v127 = vmul.f32 -0.5, %v123
      %v128 = vadd.f32 %v127, 1.0
      %v129 = vmul.f32 %v128, %v123
      %v130 = vand.u32 2147483647, %v123
      %vm131 = vcmp.lt.f32.partialorder %v130, 0.0004427343
      %v132 = vsel %vm131, %v129, %v126
      %v133 = vadd.f32 %v119, %v132
      %v134 = vadd.f32 %v116, %v133
      %v135 = vmul.f32 %v112, %v112
      %v136 = vmul.f32 %v135, 0.005
      %v137 = vsub.f32 -3.2215235, %v136
      %v138 = vsub.f32 %v112, 4.0
      %v139 = vmul.f32 %v138, %v138
      %v140 = vmul.f32 %v139, 12.5
      %v141 = vsub.f32 0.33382443, %v140
      %v142 = vmul.f32 %v112, -200.0
      %v143 = vadd.f32 %v142, -0.84729785
      %v144 = vmax.f32 %v143, 0.0
      %v145 = vand.u32 2147483647, %v143
      %v146 = vsub.f32 0.0, %v145
      %v147 = vmul.f32 %v146, 1.442695
      %v148 = vpow.pop %v147
      %v149 = vadd.f32 %v148, 1.0
      %v150 = vlog2.pop %v149
      %v151 = vmul.f32 %v150, 0.6931472
      %v152 = vmul.f32 -0.5, %v148
      %v153 = vadd.f32 %v152, 1.0
      %v154 = vmul.f32 %v153, %v148
      %v155 = vand.u32 2147483647, %v148
      %vm156 = vcmp.lt.f32.partialorder %v155, 0.0004427343
      %v157 = vsel %vm156, %v154, %v151
      %v158 = vadd.f32 %v144, %v157
      %v159 = vadd.f32 %v141, %v158
      %v160 = vsub.f32 %v134, %v137
      %v161 = vsub.f32 %v160, %v159
      %162 = vst [vmem:[%s111] sm:$0xff] %v161
      %p163 = scmp.lt.s32.totalorder %s12, 1
      %s164 = scalar_select %p163, %s12, 1
      %s165 = smul.addr %s164, 8
      %s166 = scalar_lea.vmem %s1, %s165
      // Predicated region
      $region25: #{_h_forward_impl.1} parent=23 // pred_check
        %p167 = pneg %p56
      $region26: #{_h_forward_impl.1} parent=23 // pred_check_branch
        %169 = sbr.rel (%p167) target = $region28
      $region27: #{_h_forward_impl.1} parent=23 // pred_region
        _
      $region28: #{_h_forward_impl.1} parent=23 // pred_fallthru
        _
    $region24: #{_h_forward_impl.1} parent=5 // pred_fallthru
      _
    %p170 = scmp.le.s32.totalorder 2, %s7
    // Predicated region
    $region29: #{_h_forward_impl.1} parent=5 // pred_check
      %p171 = pneg %p170
    $region30: #{_h_forward_impl.1} parent=5 // pred_check_branch
      %173 = sbr.rel (%p171) target = $region32
    $region31: #{_h_forward_impl.1} parent=5 // pred_region
      %s174 = ssub.s32 %s7, 2
      // Predicated region
      $region33: #{_h_forward_impl.1} parent=31 // pred_check
        %p175 = pneg %p62
      $region34: #{_h_forward_impl.1} parent=31 // pred_check_branch
        %177 = sbr.rel (%p175) target = $region36
      $region35: #{_h_forward_impl.1} parent=31 // pred_region
        %p178 = scmp.lt.s32.totalorder %s13, 1
        %s179 = scalar_select %p178, %s13, 1
        %s180 = smul.addr %s179, 8
        %s181 = scalar_lea.vmem %s1, %s180
      $region36: #{_h_forward_impl.1} parent=31 // pred_fallthru
        _
    $region32: #{_h_forward_impl.1} parent=5 // pred_fallthru
      _
  $region6: #{_h_forward_impl.1} parent=0 // loop_footer
    %s11 = sadd.s32 1, %s7
  $region7: #{_h_forward_impl.1} parent=0 // loop_footer_branch
    %6 = sbr.rel target = $region3
  $region8: #{_h_forward_impl.1} parent=0 // loop_exit
    _

</llo_original>
